<compile_context>
chip_gen: v7x
topology: tpu7x:2x2x1
jax: 0.10.0
libtpu: 0.0.40
codegen_flags: <defaults>
</compile_context>

<pallas_src>
import jax
import jax.numpy as jnp
from jax.experimental import pallas as pl
from jax.experimental.pallas import tpu as pltpu

LANES = 128


def relu_conv1x1_kernel(x_ref, w_ref, b_ref, o_ref):
    # x_ref: (1, Cin, TS, 128) VMEM
    # w_ref: (Cout*Cin,) SMEM scalars   b_ref: (Cout,) SMEM scalars
    # o_ref: (1, Cout, TS, 128) VMEM
    cin = x_ref.shape[1]
    cout = o_ref.shape[1]

    # ReLU on full (Cin, TS, 128) slab -> full-width VPU ops.
    x = jnp.maximum(x_ref[0], 0.0)

    # 1x1 conv as Cout*Cin full-vreg FMAs; each output channel stored directly
    # as an unmasked lane-dense vst (no concatenate, one live accumulator).
    for o in range(cout):
        acc = x[0] * w_ref[o * cin + 0]
        for c in range(1, cin):
            acc = acc + x[c] * w_ref[o * cin + c]
        o_ref[0, o] = (acc + b_ref[o]).astype(o_ref.dtype)


def _round_up(a, b):
    return ((a + b - 1) // b) * b


def relu_conv1x1(x_nchw, weight, bias):
    """x_nchw: (N, Cin, H, W); weight: (Cout, Cin, 1, 1); bias: (Cout,)."""
    N, Cin, H, W = x_nchw.shape
    Cout = weight.shape[0]
    M = H * W

    # Restructure pixels into (rows, 128) slabs. Free reshape when M % 128 == 0;
    # otherwise pad the (tiny) tail once.
    if M % LANES == 0:
        Mrows = M // LANES
        x_rows = x_nchw.reshape(N, Cin, Mrows, LANES)
        padded = False
    else:
        Mp = _round_up(M, LANES)
        Mrows = Mp // LANES
        x_flat = x_nchw.reshape(N, Cin, M)
        x_flat = jnp.pad(x_flat, ((0, 0), (0, 0), (0, Mp - M)))
        x_rows = x_flat.reshape(N, Cin, Mrows, LANES)
        padded = True

    # Row-tile size: sublane multiple (8), cap 256 rows (32K px / step,
    # ~2.6 MiB double-buffered -> fits v7x 64 MiB VMEM easily); aim for >=4
    # grid steps along the pixel axis so v7x megacore has work even at N=1.
    if Mrows <= 8:
        TS = Mrows                      # full extent (allowed block shape)
    else:
        TS = max(8, min(256, _round_up(pl.cdiv(Mrows, 4), 8)))

    w_flat = weight.reshape(Cout * Cin)   # 21 scalars -> 1-D SMEM
    b_vec = bias.reshape(Cout)            # 3 scalars  -> 1-D SMEM

    out = pl.pallas_call(
        relu_conv1x1_kernel,
        out_shape=jax.ShapeDtypeStruct((N, Cout, Mrows, LANES), x_nchw.dtype),
        grid=(N, pl.cdiv(Mrows, TS)),
        in_specs=[
            pl.BlockSpec((1, Cin, TS, LANES), lambda n, r: (n, 0, r, 0)),
            pl.BlockSpec(memory_space=pltpu.MemorySpace.SMEM),
            pl.BlockSpec(memory_space=pltpu.MemorySpace.SMEM),
        ],
        out_specs=pl.BlockSpec((1, Cout, TS, LANES), lambda n, r: (n, 0, r, 0)),
        compiler_params=pltpu.CompilerParams(
            dimension_semantics=("parallel", "parallel")),
    )(x_rows, w_flat, b_vec)

    if padded:
        out = out.reshape(N, Cout, Mrows * LANES)[:, :, :M]
    return out.reshape(N, Cout, H, W)


if __name__ == "__main__":
    key = jax.random.PRNGKey(0)
    kx, kw, kb = jax.random.split(key, 3)

    # Input shape from the PyTorch script: (1, 7, 10, 10)
    x = jax.random.normal(kx, (1, 7, 10, 10), dtype=jnp.float32)

    # Deterministic Conv2d(7, 3, 1) parameters (PyTorch-style uniform fan-in init).
    cin, cout = 7, 3
    bound = 1.0 / (cin ** 0.5)
    weight = jax.random.uniform(kw, (cout, cin, 1, 1), jnp.float32, -bound, bound)
    bias = jax.random.uniform(kb, (cout,), jnp.float32, -bound, bound)

    out = relu_conv1x1(x, weight, bias)
    out = jax.block_until_ready(out)

    # Reference check in plain JAX.
    ref = jnp.einsum("nchw,oc->nohw",
                     jnp.maximum(x, 0.0),
                     weight.reshape(cout, cin)) + bias.reshape(1, cout, 1, 1)
    assert out.shape == (1, 3, 10, 10)
    assert jnp.allclose(out, ref, atol=1e-5), "mismatch vs reference"

    print("KERNEL_OK")
</pallas_src>

<mosaic_0001>
module attributes {stable_mosaic.version = 11 : i64} {
  func.func @relu_conv1x1_kernel(%arg0: i32, %arg1: i32, %arg2: memref<1x7x1x128xf32, #tpu.memory_space<vmem>>, %arg3: memref<21xf32, #tpu.memory_space<smem>>, %arg4: memref<3xf32, #tpu.memory_space<smem>>, %arg5: memref<1x3x1x128xf32, #tpu.memory_space<vmem>>) attributes {dimension_semantics = [#tpu.dimension_semantics<parallel>, #tpu.dimension_semantics<parallel>], iteration_bounds = array<i64: 1, 1>, scalar_prefetch = 0 : i64, scratch_operands = 0 : i64, tpu.core_type = #tpu.core_type<tc>, window_params = [{transform_indices = @transform_0, window_bounds = array<i64: 1, 7, 1, 128>}, {transform_indices = @transform_1, window_bounds = array<i64: 21>}, {transform_indices = @transform_2, window_bounds = array<i64: 3>}, {transform_indices = @transform_3, window_bounds = array<i64: 1, 3, 1, 128>}]} {
    %c0 = arith.constant 0 : index
    %c0_0 = arith.constant 0 : index
    %c0_1 = arith.constant 0 : index
    %c0_2 = arith.constant 0 : index
    %0 = vector.load %arg2[%c0, %c0_0, %c0_1, %c0_2] : memref<1x7x1x128xf32, #tpu.memory_space<vmem>>, vector<1x7x1x128xf32>
    %1 = vector.shape_cast %0 : vector<1x7x1x128xf32> to vector<7x1x128xf32>
    %cst = arith.constant 0.000000e+00 : f32
    %2 = vector.broadcast %cst : f32 to vector<7x1x128xf32>
    %3 = arith.maximumf %1, %2 : vector<7x1x128xf32>
    %4 = vector.extract_strided_slice %3 {offsets = [0, 0, 0], sizes = [1, 1, 128], strides = [1, 1, 1]} : vector<7x1x128xf32> to vector<1x1x128xf32>
    %5 = vector.shape_cast %4 : vector<1x1x128xf32> to vector<1x128xf32>
    %c0_3 = arith.constant 0 : index
    %6 = memref.load %arg3[%c0_3] : memref<21xf32, #tpu.memory_space<smem>>
    %7 = vector.broadcast %6 : f32 to vector<1x128xf32>
    %8 = arith.mulf %5, %7 : vector<1x128xf32>
    %9 = vector.extract_strided_slice %3 {offsets = [1, 0, 0], sizes = [1, 1, 128], strides = [1, 1, 1]} : vector<7x1x128xf32> to vector<1x1x128xf32>
    %10 = vector.shape_cast %9 : vector<1x1x128xf32> to vector<1x128xf32>
    %c1 = arith.constant 1 : index
    %11 = memref.load %arg3[%c1] : memref<21xf32, #tpu.memory_space<smem>>
    %12 = vector.broadcast %11 : f32 to vector<1x128xf32>
    %13 = arith.mulf %10, %12 : vector<1x128xf32>
    %14 = arith.addf %8, %13 : vector<1x128xf32>
    %15 = vector.extract_strided_slice %3 {offsets = [2, 0, 0], sizes = [1, 1, 128], strides = [1, 1, 1]} : vector<7x1x128xf32> to vector<1x1x128xf32>
    %16 = vector.shape_cast %15 : vector<1x1x128xf32> to vector<1x128xf32>
    %c2 = arith.constant 2 : index
    %17 = memref.load %arg3[%c2] : memref<21xf32, #tpu.memory_space<smem>>
    %18 = vector.broadcast %17 : f32 to vector<1x128xf32>
    %19 = arith.mulf %16, %18 : vector<1x128xf32>
    %20 = arith.addf %14, %19 : vector<1x128xf32>
    %21 = vector.extract_strided_slice %3 {offsets = [3, 0, 0], sizes = [1, 1, 128], strides = [1, 1, 1]} : vector<7x1x128xf32> to vector<1x1x128xf32>
    %22 = vector.shape_cast %21 : vector<1x1x128xf32> to vector<1x128xf32>
    %c3 = arith.constant 3 : index
    %23 = memref.load %arg3[%c3] : memref<21xf32, #tpu.memory_space<smem>>
    %24 = vector.broadcast %23 : f32 to vector<1x128xf32>
    %25 = arith.mulf %22, %24 : vector<1x128xf32>
    %26 = arith.addf %20, %25 : vector<1x128xf32>
    %27 = vector.extract_strided_slice %3 {offsets = [4, 0, 0], sizes = [1, 1, 128], strides = [1, 1, 1]} : vector<7x1x128xf32> to vector<1x1x128xf32>
    %28 = vector.shape_cast %27 : vector<1x1x128xf32> to vector<1x128xf32>
    %c4 = arith.constant 4 : index
    %29 = memref.load %arg3[%c4] : memref<21xf32, #tpu.memory_space<smem>>
    %30 = vector.broadcast %29 : f32 to vector<1x128xf32>
    %31 = arith.mulf %28, %30 : vector<1x128xf32>
    %32 = arith.addf %26, %31 : vector<1x128xf32>
    %33 = vector.extract_strided_slice %3 {offsets = [5, 0, 0], sizes = [1, 1, 128], strides = [1, 1, 1]} : vector<7x1x128xf32> to vector<1x1x128xf32>
    %34 = vector.shape_cast %33 : vector<1x1x128xf32> to vector<1x128xf32>
    %c5 = arith.constant 5 : index
    %35 = memref.load %arg3[%c5] : memref<21xf32, #tpu.memory_space<smem>>
    %36 = vector.broadcast %35 : f32 to vector<1x128xf32>
    %37 = arith.mulf %34, %36 : vector<1x128xf32>
    %38 = arith.addf %32, %37 : vector<1x128xf32>
    %39 = vector.extract_strided_slice %3 {offsets = [6, 0, 0], sizes = [1, 1, 128], strides = [1, 1, 1]} : vector<7x1x128xf32> to vector<1x1x128xf32>
    %40 = vector.shape_cast %39 : vector<1x1x128xf32> to vector<1x128xf32>
    %c6 = arith.constant 6 : index
    %41 = memref.load %arg3[%c6] : memref<21xf32, #tpu.memory_space<smem>>
    %42 = vector.broadcast %41 : f32 to vector<1x128xf32>
    %43 = arith.mulf %40, %42 : vector<1x128xf32>
    %44 = arith.addf %38, %43 : vector<1x128xf32>
    %c0_4 = arith.constant 0 : index
    %45 = memref.load %arg4[%c0_4] : memref<3xf32, #tpu.memory_space<smem>>
    %46 = vector.broadcast %45 : f32 to vector<1x128xf32>
    %47 = arith.addf %44, %46 : vector<1x128xf32>
    %c0_5 = arith.constant 0 : index
    %c0_6 = arith.constant 0 : index
    %c0_7 = arith.constant 0 : index
    %c0_8 = arith.constant 0 : index
    %48 = vector.load %arg5[%c0_5, %c0_6, %c0_7, %c0_8] : memref<1x3x1x128xf32, #tpu.memory_space<vmem>>, vector<1x1x1x128xf32>
    %49 = vector.shape_cast %48 : vector<1x1x1x128xf32> to vector<1x128xf32>
    %50 = vector.shape_cast %47 : vector<1x128xf32> to vector<1x1x1x128xf32>
    tpu.vector_store %arg5[%c0_5, %c0_6, %c0_7, %c0_8], %50 {strides = array<i32>} : memref<1x3x1x128xf32, #tpu.memory_space<vmem>>, vector<1x1x1x128xf32>,
    %51 = vector.extract_strided_slice %3 {offsets = [0, 0, 0], sizes = [1, 1, 128], strides = [1, 1, 1]} : vector<7x1x128xf32> to vector<1x1x128xf32>
    %52 = vector.shape_cast %51 : vector<1x1x128xf32> to vector<1x128xf32>
    %c7 = arith.constant 7 : index
    %53 = memref.load %arg3[%c7] : memref<21xf32, #tpu.memory_space<smem>>
    %54 = vector.broadcast %53 : f32 to vector<1x128xf32>
    %55 = arith.mulf %52, %54 : vector<1x128xf32>
    %56 = vector.extract_strided_slice %3 {offsets = [1, 0, 0], sizes = [1, 1, 128], strides = [1, 1, 1]} : vector<7x1x128xf32> to vector<1x1x128xf32>
    %57 = vector.shape_cast %56 : vector<1x1x128xf32> to vector<1x128xf32>
    %c8 = arith.constant 8 : index
    %58 = memref.load %arg3[%c8] : memref<21xf32, #tpu.memory_space<smem>>
    %59 = vector.broadcast %58 : f32 to vector<1x128xf32>
    %60 = arith.mulf %57, %59 : vector<1x128xf32>
    %61 = arith.addf %55, %60 : vector<1x128xf32>
    %62 = vector.extract_strided_slice %3 {offsets = [2, 0, 0], sizes = [1, 1, 128], strides = [1, 1, 1]} : vector<7x1x128xf32> to vector<1x1x128xf32>
    %63 = vector.shape_cast %62 : vector<1x1x128xf32> to vector<1x128xf32>
    %c9 = arith.constant 9 : index
    %64 = memref.load %arg3[%c9] : memref<21xf32, #tpu.memory_space<smem>>
    %65 = vector.broadcast %64 : f32 to vector<1x128xf32>
    %66 = arith.mulf %63, %65 : vector<1x128xf32>
    %67 = arith.addf %61, %66 : vector<1x128xf32>
    %68 = vector.extract_strided_slice %3 {offsets = [3, 0, 0], sizes = [1, 1, 128], strides = [1, 1, 1]} : vector<7x1x128xf32> to vector<1x1x128xf32>
    %69 = vector.shape_cast %68 : vector<1x1x128xf32> to vector<1x128xf32>
    %c10 = arith.constant 10 : index
    %70 = memref.load %arg3[%c10] : memref<21xf32, #tpu.memory_space<smem>>
    %71 = vector.broadcast %70 : f32 to vector<1x128xf32>
    %72 = arith.mulf %69, %71 : vector<1x128xf32>
    %73 = arith.addf %67, %72 : vector<1x128xf32>
    %74 = vector.extract_strided_slice %3 {offsets = [4, 0, 0], sizes = [1, 1, 128], strides = [1, 1, 1]} : vector<7x1x128xf32> to vector<1x1x128xf32>
    %75 = vector.shape_cast %74 : vector<1x1x128xf32> to vector<1x128xf32>
    %c11 = arith.constant 11 : index
    %76 = memref.load %arg3[%c11] : memref<21xf32, #tpu.memory_space<smem>>
    %77 = vector.broadcast %76 : f32 to vector<1x128xf32>
    %78 = arith.mulf %75, %77 : vector<1x128xf32>
    %79 = arith.addf %73, %78 : vector<1x128xf32>
    %80 = vector.extract_strided_slice %3 {offsets = [5, 0, 0], sizes = [1, 1, 128], strides = [1, 1, 1]} : vector<7x1x128xf32> to vector<1x1x128xf32>
    %81 = vector.shape_cast %80 : vector<1x1x128xf32> to vector<1x128xf32>
    %c12 = arith.constant 12 : index
    %82 = memref.load %arg3[%c12] : memref<21xf32, #tpu.memory_space<smem>>
    %83 = vector.broadcast %82 : f32 to vector<1x128xf32>
    %84 = arith.mulf %81, %83 : vector<1x128xf32>
    %85 = arith.addf %79, %84 : vector<1x128xf32>
    %86 = vector.extract_strided_slice %3 {offsets = [6, 0, 0], sizes = [1, 1, 128], strides = [1, 1, 1]} : vector<7x1x128xf32> to vector<1x1x128xf32>
    %87 = vector.shape_cast %86 : vector<1x1x128xf32> to vector<1x128xf32>
    %c13 = arith.constant 13 : index
    %88 = memref.load %arg3[%c13] : memref<21xf32, #tpu.memory_space<smem>>
    %89 = vector.broadcast %88 : f32 to vector<1x128xf32>
    %90 = arith.mulf %87, %89 : vector<1x128xf32>
    %91 = arith.addf %85, %90 : vector<1x128xf32>
    %c1_9 = arith.constant 1 : index
    %92 = memref.load %arg4[%c1_9] : memref<3xf32, #tpu.memory_space<smem>>
    %93 = vector.broadcast %92 : f32 to vector<1x128xf32>
    %94 = arith.addf %91, %93 : vector<1x128xf32>
    %c0_10 = arith.constant 0 : index
    %c1_11 = arith.constant 1 : index
    %c0_12 = arith.constant 0 : index
    %c0_13 = arith.constant 0 : index
    %95 = vector.load %arg5[%c0_10, %c1_11, %c0_12, %c0_13] : memref<1x3x1x128xf32, #tpu.memory_space<vmem>>, vector<1x1x1x128xf32>
    %96 = vector.shape_cast %95 : vector<1x1x1x128xf32> to vector<1x128xf32>
    %97 = vector.shape_cast %94 : vector<1x128xf32> to vector<1x1x1x128xf32>
    tpu.vector_store %arg5[%c0_10, %c1_11, %c0_12, %c0_13], %97 {strides = array<i32>} : memref<1x3x1x128xf32, #tpu.memory_space<vmem>>, vector<1x1x1x128xf32>,
    %98 = vector.extract_strided_slice %3 {offsets = [0, 0, 0], sizes = [1, 1, 128], strides = [1, 1, 1]} : vector<7x1x128xf32> to vector<1x1x128xf32>
    %99 = vector.shape_cast %98 : vector<1x1x128xf32> to vector<1x128xf32>
    %c14 = arith.constant 14 : index
    %100 = memref.load %arg3[%c14] : memref<21xf32, #tpu.memory_space<smem>>
    %101 = vector.broadcast %100 : f32 to vector<1x128xf32>
    %102 = arith.mulf %99, %101 : vector<1x128xf32>
    %103 = vector.extract_strided_slice %3 {offsets = [1, 0, 0], sizes = [1, 1, 128], strides = [1, 1, 1]} : vector<7x1x128xf32> to vector<1x1x128xf32>
    %104 = vector.shape_cast %103 : vector<1x1x128xf32> to vector<1x128xf32>
    %c15 = arith.constant 15 : index
    %105 = memref.load %arg3[%c15] : memref<21xf32, #tpu.memory_space<smem>>
    %106 = vector.broadcast %105 : f32 to vector<1x128xf32>
    %107 = arith.mulf %104, %106 : vector<1x128xf32>
    %108 = arith.addf %102, %107 : vector<1x128xf32>
    %109 = vector.extract_strided_slice %3 {offsets = [2, 0, 0], sizes = [1, 1, 128], strides = [1, 1, 1]} : vector<7x1x128xf32> to vector<1x1x128xf32>
    %110 = vector.shape_cast %109 : vector<1x1x128xf32> to vector<1x128xf32>
    %c16 = arith.constant 16 : index
    %111 = memref.load %arg3[%c16] : memref<21xf32, #tpu.memory_space<smem>>
    %112 = vector.broadcast %111 : f32 to vector<1x128xf32>
    %113 = arith.mulf %110, %112 : vector<1x128xf32>
    %114 = arith.addf %108, %113 : vector<1x128xf32>
    %115 = vector.extract_strided_slice %3 {offsets = [3, 0, 0], sizes = [1, 1, 128], strides = [1, 1, 1]} : vector<7x1x128xf32> to vector<1x1x128xf32>
    %116 = vector.shape_cast %115 : vector<1x1x128xf32> to vector<1x128xf32>
    %c17 = arith.constant 17 : index
    %117 = memref.load %arg3[%c17] : memref<21xf32, #tpu.memory_space<smem>>
    %118 = vector.broadcast %117 : f32 to vector<1x128xf32>
    %119 = arith.mulf %116, %118 : vector<1x128xf32>
    %120 = arith.addf %114, %119 : vector<1x128xf32>
    %121 = vector.extract_strided_slice %3 {offsets = [4, 0, 0], sizes = [1, 1, 128], strides = [1, 1, 1]} : vector<7x1x128xf32> to vector<1x1x128xf32>
    %122 = vector.shape_cast %121 : vector<1x1x128xf32> to vector<1x128xf32>
    %c18 = arith.constant 18 : index
    %123 = memref.load %arg3[%c18] : memref<21xf32, #tpu.memory_space<smem>>
    %124 = vector.broadcast %123 : f32 to vector<1x128xf32>
    %125 = arith.mulf %122, %124 : vector<1x128xf32>
    %126 = arith.addf %120, %125 : vector<1x128xf32>
    %127 = vector.extract_strided_slice %3 {offsets = [5, 0, 0], sizes = [1, 1, 128], strides = [1, 1, 1]} : vector<7x1x128xf32> to vector<1x1x128xf32>
    %128 = vector.shape_cast %127 : vector<1x1x128xf32> to vector<1x128xf32>
    %c19 = arith.constant 19 : index
    %129 = memref.load %arg3[%c19] : memref<21xf32, #tpu.memory_space<smem>>
    %130 = vector.broadcast %129 : f32 to vector<1x128xf32>
    %131 = arith.mulf %128, %130 : vector<1x128xf32>
    %132 = arith.addf %126, %131 : vector<1x128xf32>
    %133 = vector.extract_strided_slice %3 {offsets = [6, 0, 0], sizes = [1, 1, 128], strides = [1, 1, 1]} : vector<7x1x128xf32> to vector<1x1x128xf32>
    %134 = vector.shape_cast %133 : vector<1x1x128xf32> to vector<1x128xf32>
    %c20 = arith.constant 20 : index
    %135 = memref.load %arg3[%c20] : memref<21xf32, #tpu.memory_space<smem>>
    %136 = vector.broadcast %135 : f32 to vector<1x128xf32>
    %137 = arith.mulf %134, %136 : vector<1x128xf32>
    %138 = arith.addf %132, %137 : vector<1x128xf32>
    %c2_14 = arith.constant 2 : index
    %139 = memref.load %arg4[%c2_14] : memref<3xf32, #tpu.memory_space<smem>>
    %140 = vector.broadcast %139 : f32 to vector<1x128xf32>
    %141 = arith.addf %138, %140 : vector<1x128xf32>
    %c0_15 = arith.constant 0 : index
    %c2_16 = arith.constant 2 : index
    %c0_17 = arith.constant 0 : index
    %c0_18 = arith.constant 0 : index
    %142 = vector.load %arg5[%c0_15, %c2_16, %c0_17, %c0_18] : memref<1x3x1x128xf32, #tpu.memory_space<vmem>>, vector<1x1x1x128xf32>
    %143 = vector.shape_cast %142 : vector<1x1x1x128xf32> to vector<1x128xf32>
    %144 = vector.shape_cast %141 : vector<1x128xf32> to vector<1x1x1x128xf32>
    tpu.vector_store %arg5[%c0_15, %c2_16, %c0_17, %c0_18], %144 {strides = array<i32>} : memref<1x3x1x128xf32, #tpu.memory_space<vmem>>, vector<1x1x1x128xf32>,
    return
  }
  func.func @transform_0(%arg0: i32, %arg1: i32) -> (i32, i32, i32, i32) {
    %c0_i32 = arith.constant 0 : i32
    %c0_i32_0 = arith.constant 0 : i32
    %c0_i32_1 = arith.constant 0 : i32
    return %arg0, %c0_i32, %arg1, %c0_i32_0 : i32, i32, i32, i32
  }
  func.func @transform_1(%arg0: i32, %arg1: i32) -> i32 {
    %c0_i32 = arith.constant 0 : i32
    %c0_i32_0 = arith.constant 0 : i32
    return %c0_i32 : i32
  }
  func.func @transform_2(%arg0: i32, %arg1: i32) -> i32 {
    %c0_i32 = arith.constant 0 : i32
    %c0_i32_0 = arith.constant 0 : i32
    return %c0_i32 : i32
  }
  func.func @transform_3(%arg0: i32, %arg1: i32) -> (i32, i32, i32, i32) {
    %c0_i32 = arith.constant 0 : i32
    %c0_i32_0 = arith.constant 0 : i32
    %c0_i32_1 = arith.constant 0 : i32
    return %arg0, %c0_i32, %arg1, %c0_i32_0 : i32, i32, i32, i32
  }
}

</mosaic_0001>

<llo_original>
// kernel: tpu_custom_call.1
$region0: #{tpu_custom_call.1}
  #allocation0 [shape = 'u32[]', space=smem, size = 0x4, offset = 0x4, fixed_abs, tag = 'smem constant byte address 0x4 - core index']
  #allocation1 [shape = 'u32[144,128]{1,0:T(1,128)}', space=vmem, size = 0x12000, scoped, tag = 'internal scratch']
  %s0 = inlined_call_operand.hbm [shape: f32[1,7,1,128], index: 0, kind: input, shape index: {}]
  %s1 = inlined_call_operand.vmem [shape: f32[21], index: 1, kind: input, shape index: {}]
  %s2 = inlined_call_operand.vmem [shape: f32[3], index: 2, kind: input, shape index: {}]
  %s3 = inlined_call_operand.hbm [shape: f32[1,3,1,128], index: 3, kind: output, shape index: {}]
  %s4 = sld [smem:[#allocation0]]
  $region34: #{tpu_custom_call.1} parent=0
    _
  %s6 = ssub.s32 1, %s4
  %s7 = scalar_select 0, %s6, %s4
  $region1: #{tpu_custom_call.1} parent=0
    #allocation2 [shape = 'u8[3584]{0}', space=vmem, size = 0x1000, scoped, tag = 'input window, operand 0, single buffered']
    #allocation3 [shape = 's32[1]{0}', space=sflag, size = 0x4, scoped, tag = 'scoped memory for tpu_custom_call.1']
    #allocation4 [shape = 's32[1]{0}', space=sflag, size = 0x4, scoped, tag = 'scoped memory for tpu_custom_call.1']
    #allocation5 [shape = 's32[1]{0}', space=sflag, size = 0x4, scoped, tag = 'scoped memory for tpu_custom_call.1']
    #allocation6 [shape = 'u8[512]{0}', space=smem, size = 0x200, scoped, tag = 'input window, operand 1, single buffered']
    #allocation7 [shape = 'u8[512]{0}', space=smem, size = 0x200, scoped, tag = 'input window, operand 2, single buffered']
    #allocation8 [shape = 's32[1]{0}', space=sflag, size = 0x4, scoped, tag = 'scoped memory for tpu_custom_call.1']
    #allocation9 [shape = 'u8[1536]{0}', space=vmem, size = 0x800, scoped, tag = 'output window, operand 0, single buffered']
    %8 = vsyncpa [#allocation3], 0
    %9 = vsyncpa [#allocation5], 0
    %10 = vsyncpa [#allocation8], 0
    %11 = vsyncpa [#allocation4], 0
    // Predicated region
    $region2: #{tpu_custom_call.1} parent=1 // pred_check
      _
    $region3: #{tpu_custom_call.1} parent=1 // pred_check_branch
      %13 = sbr.rel (0) target = $region5
    $region4: #{tpu_custom_call.1} parent=1 // pred_region
      %s15 = ssub.s32 112, 112
      %16 = vsyncadd [#allocation3], %s15
      %s17 = sshll.u32 [#allocation2], 4
      %s18 = int_to_ptr.vmem [resolvable:$true] %s17
      %23 = dma.hbm_to_vmem [thread:$0]  %s0, 112, %s18, [#allocation3], 16, 16, 1
    $region5: #{tpu_custom_call.1} parent=1 // pred_fallthru
      _
    // Predicated region
    $region6: #{tpu_custom_call.1} parent=1 // pred_check
      _
    $region7: #{tpu_custom_call.1} parent=1 // pred_check_branch
      %25 = sbr.rel (0) target = $region9
    $region8: #{tpu_custom_call.1} parent=1 // pred_region
      %s27 = ssub.s32 16, 16
      %28 = vsyncadd [#allocation5], %s27
      %s30 = sshll.u32 %s1, 4
      %s31 = int_to_ptr.vmem [resolvable:$true] %s30
      %33 = dma.vmem_to_smem %s31, 16, [#allocation6], [#allocation5]
    $region9: #{tpu_custom_call.1} parent=1 // pred_fallthru
      _
    // Predicated region
    $region10: #{tpu_custom_call.1} parent=1 // pred_check
      _
    $region11: #{tpu_custom_call.1} parent=1 // pred_check_branch
      %35 = sbr.rel (0) target = $region13
    $region12: #{tpu_custom_call.1} parent=1 // pred_region
      %s37 = ssub.s32 16, 16
      %38 = vsyncadd [#allocation8], %s37
      %s40 = sshll.u32 %s2, 4
      %s41 = int_to_ptr.vmem [resolvable:$true] %s40
      %43 = dma.vmem_to_smem %s41, 16, [#allocation7], [#allocation8]
    $region13: #{tpu_custom_call.1} parent=1 // pred_fallthru
      _
    // Predicated region
    $region14: #{tpu_custom_call.1} parent=1 // pred_check
      _
    $region15: #{tpu_custom_call.1} parent=1 // pred_check_branch
      %45 = sbr.rel (0) target = $region17
    $region16: #{tpu_custom_call.1} parent=1 // pred_region
      %46 = dma.done [#allocation3], 112
    $region17: #{tpu_custom_call.1} parent=1 // pred_fallthru
      _
    // Predicated region
    $region18: #{tpu_custom_call.1} parent=1 // pred_check
      _
    $region19: #{tpu_custom_call.1} parent=1 // pred_check_branch
      %48 = sbr.rel (0) target = $region21
    $region20: #{tpu_custom_call.1} parent=1 // pred_region
      %49 = dma.done [#allocation5], 16
    $region21: #{tpu_custom_call.1} parent=1 // pred_fallthru
      _
    // Predicated region
    $region22: #{tpu_custom_call.1} parent=1 // pred_check
      _
    $region23: #{tpu_custom_call.1} parent=1 // pred_check_branch
      %51 = sbr.rel (0) target = $region25
    $region24: #{tpu_custom_call.1} parent=1 // pred_region
      %52 = dma.done [#allocation8], 16
    $region25: #{tpu_custom_call.1} parent=1 // pred_fallthru
      _
    %53 = sfence
    %v54 = vld [vmem:[#allocation2] sm:$0x1]
    %v55 = vld [vmem:[#allocation2 + $0x1] sm:$0x1]
    %v56 = vld [vmem:[#allocation2 + $0x2] sm:$0x1]
    %v57 = vld [vmem:[#allocation2 + $0x3] sm:$0x1]
    %v58 = vld [vmem:[#allocation2 + $0x4] sm:$0x1]
    %v59 = vld [vmem:[#allocation2 + $0x5] sm:$0x1]
    %v60 = vld [vmem:[#allocation2 + $0x6] sm:$0x1]
    %v61 = vmax.f32 %v54, 0.0
    %v62 = vmax.f32 %v55, 0.0
    %v63 = vmax.f32 %v56, 0.0
    %v64 = vmax.f32 %v57, 0.0
    %v65 = vmax.f32 %v58, 0.0
    %v66 = vmax.f32 %v59, 0.0
    %v67 = vmax.f32 %v60, 0.0
    %s68 = sld [smem:[#allocation6]]
    %v69 = vstv %s68
    %v70 = vmul.f32 %v61, %v69
    %s71 = sld [smem:[#allocation6 + $0x1]]
    %v72 = vstv %s71
    %v73 = vmul.f32 %v62, %v72
    %v74 = vadd.f32 %v70, %v73
    %s75 = sld [smem:[#allocation6 + $0x2]]
    %v76 = vstv %s75
    %v77 = vmul.f32 %v63, %v76
    %v78 = vadd.f32 %v74, %v77
    %s79 = sld [smem:[#allocation6 + $0x3]]
    %v80 = vstv %s79
    %v81 = vmul.f32 %v64, %v80
    %v82 = vadd.f32 %v78, %v81
    %s83 = sld [smem:[#allocation6 + $0x4]]
    %v84 = vstv %s83
    %v85 = vmul.f32 %v65, %v84
    %v86 = vadd.f32 %v82, %v85
    %s87 = sld [smem:[#allocation6 + $0x5]]
    %v88 = vstv %s87
    %v89 = vmul.f32 %v66, %v88
    %v90 = vadd.f32 %v86, %v89
    %s91 = sld [smem:[#allocation6 + $0x6]]
    %v92 = vstv %s91
    %v93 = vmul.f32 %v67, %v92
    %v94 = vadd.f32 %v90, %v93
    %s95 = sld [smem:[#allocation7]]
    %v96 = vstv %s95
    %v97 = vadd.f32 %v94, %v96
    %98 = vst [vmem:[#allocation9] sm:$0x1] %v97
    %s99 = sld [smem:[#allocation6 + $0x7]]
    %v100 = vstv %s99
    %v101 = vmul.f32 %v61, %v100
    %s102 = sld [smem:[#allocation6 + $0x8]]
    %v103 = vstv %s102
    %v104 = vmul.f32 %v62, %v103
    %v105 = vadd.f32 %v101, %v104
    %s106 = sld [smem:[#allocation6 + $0x9]]
    %v107 = vstv %s106
    %v108 = vmul.f32 %v63, %v107
    %v109 = vadd.f32 %v105, %v108
    %s110 = sld [smem:[#allocation6 + $0xa]]
    %v111 = vstv %s110
    %v112 = vmul.f32 %v64, %v111
    %v113 = vadd.f32 %v109, %v112
    %s114 = sld [smem:[#allocation6 + $0xb]]
    %v115 = vstv %s114
    %v116 = vmul.f32 %v65, %v115
    %v117 = vadd.f32 %v113, %v116
    %s118 = sld [smem:[#allocation6 + $0xc]]
    %v119 = vstv %s118
    %v120 = vmul.f32 %v66, %v119
    %v121 = vadd.f32 %v117, %v120
    %s122 = sld [smem:[#allocation6 + $0xd]]
    %v123 = vstv %s122
    %v124 = vmul.f32 %v67, %v123
    %v125 = vadd.f32 %v121, %v124
    %s126 = sld [smem:[#allocation7 + $0x1]]
    %v127 = vstv %s126
    %v128 = vadd.f32 %v125, %v127
    %s129 = scalar_lea.vmem [#allocation9], 1
    %130 = vst [vmem:[%s129] sm:$0x1] %v128
    %s131 = sld [smem:[#allocation6 + $0xe]]
    %v132 = vstv %s131
    %v133 = vmul.f32 %v61, %v132
    %s134 = sld [smem:[#allocation6 + $0xf]]
    %v135 = vstv %s134
    %v136 = vmul.f32 %v62, %v135
    %v137 = vadd.f32 %v133, %v136
    %s138 = sld [smem:[#allocation6 + $0x10]]
    %v139 = vstv %s138
    %v140 = vmul.f32 %v63, %v139
    %v141 = vadd.f32 %v137, %v140
    %s142 = sld [smem:[#allocation6 + $0x11]]
    %v143 = vstv %s142
    %v144 = vmul.f32 %v64, %v143
    %v145 = vadd.f32 %v141, %v144
    %s146 = sld [smem:[#allocation6 + $0x12]]
    %v147 = vstv %s146
    %v148 = vmul.f32 %v65, %v147
    %v149 = vadd.f32 %v145, %v148
    %s150 = sld [smem:[#allocation6 + $0x13]]
    %v151 = vstv %s150
    %v152 = vmul.f32 %v66, %v151
    %v153 = vadd.f32 %v149, %v152
    %s154 = sld [smem:[#allocation6 + $0x14]]
    %v155 = vstv %s154
    %v156 = vmul.f32 %v67, %v155
    %v157 = vadd.f32 %v153, %v156
    %s158 = sld [smem:[#allocation7 + $0x2]]
    %v159 = vstv %s158
    %v160 = vadd.f32 %v157, %v159
    %s161 = scalar_lea.vmem [#allocation9], 2
    %162 = vst [vmem:[%s161] sm:$0x1] %v160
    // Predicated region
    $region26: #{tpu_custom_call.1} parent=1 // pred_check
      _
    $region27: #{tpu_custom_call.1} parent=1 // pred_check_branch
      %164 = sbr.rel (0) target = $region29
    $region28: #{tpu_custom_call.1} parent=1 // pred_region
      %s166 = ssub.s32 48, 48
      %167 = vsyncadd [#allocation4], %s166
      %s168 = sshll.u32 [#allocation9], 4
      %s169 = int_to_ptr.vmem [resolvable:$true] %s168
      %174 = dma.vmem_to_hbm [thread:$0]  %s169, 48, %s3, [#allocation4], 16, 16, 1
    $region29: #{tpu_custom_call.1} parent=1 // pred_fallthru
      _
    // Predicated region
    $region30: #{tpu_custom_call.1} parent=1 // pred_check
      _
    $region31: #{tpu_custom_call.1} parent=1 // pred_check_branch
      %176 = sbr.rel (0) target = $region33
    $region32: #{tpu_custom_call.1} parent=1 // pred_region
      %177 = dma.done [#allocation4], 48
    $region33: #{tpu_custom_call.1} parent=1 // pred_fallthru
      _
    %178 = vsyncpa [#allocation3], 1
    %179 = vsyncpa [#allocation4], 1
    %180 = vsyncpa [#allocation5], 1
    %181 = vsyncpa [#allocation8], 1

</llo_original>
